<compile_context>
chip_gen: v7x
topology: tpu7x:2x2x1
jax: 0.10.0
libtpu: 0.0.40
codegen_flags: <defaults>
</compile_context>

<pallas_src>
from functools import partial

import jax
import jax.numpy as jnp
from jax import lax
from jax.experimental import pallas as pl
from jax.experimental.pallas import tpu as pltpu


def _bf16_native():
    # v6e / v7x have bf16-native VPU/EUP; v5e does not (bf16 tanh would add converts).
    try:
        kind = jax.devices()[0].device_kind.lower()
    except Exception:
        return True
    return "v5" not in kind


_BF16_TANH = _bf16_native()


# ----------------------------- Pallas kernel --------------------------------

def _mmp_forward_kernel(x_ref,             # (TB, D)  f32 (cast to bf16 in-kernel)
                        w1_ref, b1_ref,    # D  -> Hp (bf16 / f32)
                        w23_ref, b23_ref,  # Hp -> Hp (fused enc-L2 @ dec-L1)
                        w4_ref, b4_ref,    # Hp -> D
                        out_ref,           # (TB, D)  f32
                        *, nchunks, bf16_tanh):
    tb = x_ref.shape[0]
    chunk = tb // nchunks
    Hp = w1_ref.shape[1]
    D = w4_ref.shape[1]

    # Weights stay VMEM-resident; hoist bias broadcasts out of the chunk loop.
    w1 = w1_ref[...]
    w23 = w23_ref[...]
    w4 = w4_ref[...]
    b1 = jnp.broadcast_to(b1_ref[...], (chunk, Hp))
    b23 = jnp.broadcast_to(b23_ref[...], (chunk, Hp))
    b4 = jnp.broadcast_to(b4_ref[...], (chunk, D))

    def chunk_body(c, carry):
        r0 = pl.multiple_of(c * chunk, chunk)
        # f32 -> bf16 cast here (VPU) instead of a separate XLA op in the wrapper.
        x = x_ref[pl.ds(r0, chunk), :].astype(jnp.bfloat16)

        # encoder layer 1 (tanh)
        a1 = jnp.dot(x, w1, preferred_element_type=jnp.float32) + b1
        h1 = jnp.tanh(a1.astype(jnp.bfloat16)) if bf16_tanh \
            else jnp.tanh(a1).astype(jnp.bfloat16)

        # fused (encoder layer 2 @ decoder layer 1), then tanh
        a2 = jnp.dot(h1, w23, preferred_element_type=jnp.float32) + b23
        h2 = jnp.tanh(a2.astype(jnp.bfloat16)) if bf16_tanh \
            else jnp.tanh(a2).astype(jnp.bfloat16)

        # decoder layer 2 (linear)
        recon = jnp.dot(h2, w4, preferred_element_type=jnp.float32) + b4
        out_ref[pl.ds(r0, chunk), :] = recon.astype(out_ref.dtype)
        return carry

    # Unrolled so the LLO scheduler can overlap chunk k's matmuls (MXU) with
    # chunk k-1's tanh (EUP) and chunk k-2's casts/bias-adds/stores (VPU/vst).
    lax.fori_loop(0, nchunks, chunk_body, 0, unroll=True)


# ------------------------ tiling / chunking selection ------------------------

def _choose_batch_tile(bs, block_bs):
    """Prefer exactly 2 grid steps (v7x's 2 TensorCores both get work via the
    'parallel' axis; single-TC chips only pay one extra ~0.35us step). Otherwise
    take the largest sublane-aligned divisor of bs <= block_bs; finally fall back
    to the whole batch in one step (block == full array, so no (8,128) rule)."""
    half = bs // 2
    if bs % 2 == 0 and half % 8 == 0 and half <= block_bs:
        return half
    cap = min(block_bs, bs)
    for tb in range(cap, 7, -1):
        if bs % tb == 0 and tb % 8 == 0:
            return tb
    return bs


def _choose_nchunks(tb):
    for n in (4, 2):
        if tb % (8 * n) == 0:
            return n
    return 1


# ------------------------------ forward wrapper ------------------------------

@partial(jax.jit, static_argnames=("block_bs",))
def discrete_mmp_forward(x, prepared_params, block_bs=512):
    """x: (bs, traj_len, 4, 4) f32 -> recon: (bs, traj_len, 4, 4) f32."""
    bs, traj_len = x.shape[0], x.shape[1]
    D = traj_len * 16
    x_flat = x.reshape(bs, D)              # contiguous reshape: metadata only

    w1, b1, w23, b23, w4, b4 = prepared_params
    Hp = w1.shape[1]

    TB = _choose_batch_tile(bs, block_bs)  # bs % TB == 0 by construction
    grid = (pl.cdiv(bs, TB),)
    nchunks = _choose_nchunks(TB)

    cost = pl.CostEstimate(
        flops=2 * bs * (D * Hp + Hp * Hp + Hp * D),
        transcendentals=2 * bs * Hp,
        bytes_accessed=(x_flat.size * 4 + bs * D * 4
                        + (w1.size + w23.size + w4.size) * 2
                        + (b1.size + b23.size + b4.size) * 4),
    )

    kernel = partial(_mmp_forward_kernel, nchunks=nchunks, bf16_tanh=_BF16_TANH)

    recon_flat = pl.pallas_call(
        kernel,
        out_shape=jax.ShapeDtypeStruct((bs, D), jnp.float32),
        grid=grid,
        in_specs=[
            pl.BlockSpec((TB, D), lambda i: (i, 0)),    # x   (tiled over batch, f32)
            pl.BlockSpec((D, Hp), lambda i: (0, 0)),    # w1  (VMEM resident)
            pl.BlockSpec((1, Hp), lambda i: (0, 0)),    # b1
            pl.BlockSpec((Hp, Hp), lambda i: (0, 0)),   # w23
            pl.BlockSpec((1, Hp), lambda i: (0, 0)),    # b23
            pl.BlockSpec((Hp, D), lambda i: (0, 0)),    # w4
            pl.BlockSpec((1, D), lambda i: (0, 0)),     # b4
        ],
        out_specs=pl.BlockSpec((TB, D), lambda i: (i, 0)),
        compiler_params=pltpu.CompilerParams(
            dimension_semantics=("parallel",)),          # v7x: both TCs get a tile
        cost_estimate=cost,
    )(x_flat, w1, b1, w23, b23, w4, b4)

    return recon_flat.reshape(bs, traj_len, 4, 4)


# --------------------------- parameter construction --------------------------

def init_params(key, D, H, Z):
    """Deterministic synthetic weights. Stored as (in, out); bias (1, out)."""
    ks = jax.random.split(key, 8)

    def lin(kw, kb, fin, fout):
        scale = 1.0 / jnp.sqrt(jnp.float32(fin))
        w = jax.random.uniform(kw, (fin, fout), jnp.float32, -scale, scale)
        b = jax.random.uniform(kb, (1, fout), jnp.float32, -scale, scale)
        return w, b

    return (
        lin(ks[0], ks[1], D, H),   # encoder L1
        lin(ks[2], ks[3], H, Z),   # encoder L2
        lin(ks[4], ks[5], Z, H),   # decoder L1
        lin(ks[6], ks[7], H, D),   # decoder L2
    )


def prepare_params(params, Hp=128):
    """Fold enc-L2/dec-L1 into one H->H matmul, zero-pad hidden to Hp, cast weights
    to bf16 (biases kept f32 for the f32 accumulation path). Done once, offline."""
    (w1, b1), (w2, b2), (w3, b3), (w4, b4) = params
    H = w1.shape[1]

    # exact algebraic fusion (no nonlinearity between the two layers)
    w23 = w2 @ w3                     # (H, H)
    b23 = b2 @ w3 + b3                # (1, H)

    pad = Hp - H
    w1p = jnp.pad(w1, ((0, 0), (0, pad)))        # (D, Hp)
    b1p = jnp.pad(b1, ((0, 0), (0, pad)))        # (1, Hp)   tanh(0)=0 on pad lanes
    w23p = jnp.pad(w23, ((0, pad), (0, pad)))    # (Hp, Hp)  pad rows are zero
    b23p = jnp.pad(b23, ((0, 0), (0, pad)))      # (1, Hp)
    w4p = jnp.pad(w4, ((0, pad), (0, 0)))        # (Hp, D)   pad rows are zero

    return (w1p.astype(jnp.bfloat16), b1p,
            w23p.astype(jnp.bfloat16), b23p,
            w4p.astype(jnp.bfloat16), b4)


def reference_forward(x, params):
    """Pure-JAX f32, un-fused reference of the same forward (correctness check)."""
    bs, traj_len = x.shape[0], x.shape[1]
    D = traj_len * 16
    h = x.reshape(bs, D)
    (w1, b1), (w2, b2), (w3, b3), (w4, b4) = params
    h = jnp.tanh(h @ w1 + b1)
    z = h @ w2 + b2
    h = jnp.tanh(z @ w3 + b3)
    out = h @ w4 + b4
    return out.reshape(bs, traj_len, 4, 4)


# ---------------------------------- main -------------------------------------

if __name__ == "__main__":
    key = jax.random.PRNGKey(0)
    k_x, k_p = jax.random.split(key)

    bs, traj_len = 256, 8          # enough rows to fill the MXU / exercise the grid
    D = traj_len * 16              # 128 flattened features per step
    H, Z = 64, 8                   # hidden width, latent dim (Z folded away offline)

    x = jax.random.normal(k_x, (bs, traj_len, 4, 4), jnp.float32)
    params = init_params(k_p, D, H, Z)
    dev_params = prepare_params(params, Hp=128)

    recon = discrete_mmp_forward(x, dev_params)
    recon = jax.block_until_ready(recon)

    ref = reference_forward(x, params)
    assert recon.shape == (bs, traj_len, 4, 4)
    # bf16 operands + layer fusion (+ bf16 tanh on v6e/v7x) -> widened tolerance
    assert jnp.allclose(recon, ref, atol=5e-2, rtol=5e-2)

    # TODO(synk): fit_GMM / sample rely on sklearn GaussianMixture and have no
    # Pallas equivalent; only the forward (encode->decode) hot path is kernelized.
    print("KERNEL_OK")
</pallas_src>

<mosaic_0001>
module attributes {stable_mosaic.version = 11 : i64} {
  func.func @_mmp_forward_kernel(%arg0: i32, %arg1: memref<128x128xf32, #tpu.memory_space<vmem>>, %arg2: memref<128x128xbf16, #tpu.memory_space<vmem>>, %arg3: memref<1x128xf32, #tpu.memory_space<vmem>>, %arg4: memref<128x128xbf16, #tpu.memory_space<vmem>>, %arg5: memref<1x128xf32, #tpu.memory_space<vmem>>, %arg6: memref<128x128xbf16, #tpu.memory_space<vmem>>, %arg7: memref<1x128xf32, #tpu.memory_space<vmem>>, %arg8: memref<128x128xf32, #tpu.memory_space<vmem>>) attributes {dimension_semantics = [#tpu.dimension_semantics<parallel>], iteration_bounds = array<i64: 2>, scalar_prefetch = 0 : i64, scratch_operands = 0 : i64, tpu.core_type = #tpu.core_type<tc>, window_params = [{transform_indices = @transform_0, window_bounds = array<i64: 128, 128>}, {pipeline_mode = #tpu.pipeline_mode<synchronous>, transform_indices = @transform_1, window_bounds = array<i64: 128, 128>}, {pipeline_mode = #tpu.pipeline_mode<synchronous>, transform_indices = @transform_2, window_bounds = array<i64: 1, 128>}, {pipeline_mode = #tpu.pipeline_mode<synchronous>, transform_indices = @transform_3, window_bounds = array<i64: 128, 128>}, {pipeline_mode = #tpu.pipeline_mode<synchronous>, transform_indices = @transform_4, window_bounds = array<i64: 1, 128>}, {pipeline_mode = #tpu.pipeline_mode<synchronous>, transform_indices = @transform_5, window_bounds = array<i64: 128, 128>}, {pipeline_mode = #tpu.pipeline_mode<synchronous>, transform_indices = @transform_6, window_bounds = array<i64: 1, 128>}, {transform_indices = @transform_7, window_bounds = array<i64: 128, 128>}]} {
    %c0 = arith.constant 0 : index
    %c0_0 = arith.constant 0 : index
    %0 = vector.load %arg2[%c0, %c0_0] : memref<128x128xbf16, #tpu.memory_space<vmem>>, vector<128x128xbf16>
    %c0_1 = arith.constant 0 : index
    %c0_2 = arith.constant 0 : index
    %1 = vector.load %arg4[%c0_1, %c0_2] : memref<128x128xbf16, #tpu.memory_space<vmem>>, vector<128x128xbf16>
    %c0_3 = arith.constant 0 : index
    %c0_4 = arith.constant 0 : index
    %2 = vector.load %arg6[%c0_3, %c0_4] : memref<128x128xbf16, #tpu.memory_space<vmem>>, vector<128x128xbf16>
    %c0_5 = arith.constant 0 : index
    %c0_6 = arith.constant 0 : index
    %3 = vector.load %arg3[%c0_5, %c0_6] : memref<1x128xf32, #tpu.memory_space<vmem>>, vector<1x128xf32>
    %4 = vector.shape_cast %3 : vector<1x128xf32> to vector<1x128xf32>
    %5 = vector.broadcast %4 : vector<1x128xf32> to vector<32x128xf32>
    %c0_7 = arith.constant 0 : index
    %c0_8 = arith.constant 0 : index
    %6 = vector.load %arg5[%c0_7, %c0_8] : memref<1x128xf32, #tpu.memory_space<vmem>>, vector<1x128xf32>
    %7 = vector.shape_cast %6 : vector<1x128xf32> to vector<1x128xf32>
    %8 = vector.broadcast %7 : vector<1x128xf32> to vector<32x128xf32>
    %c0_9 = arith.constant 0 : index
    %c0_10 = arith.constant 0 : index
    %9 = vector.load %arg7[%c0_9, %c0_10] : memref<1x128xf32, #tpu.memory_space<vmem>>, vector<1x128xf32>
    %10 = vector.shape_cast %9 : vector<1x128xf32> to vector<1x128xf32>
    %11 = vector.broadcast %10 : vector<1x128xf32> to vector<32x128xf32>
    %c0_i32 = arith.constant 0 : i32
    %c32_i32 = arith.constant 32 : i32
    %12 = arith.muli %c0_i32, %c32_i32 : i32
    %13 = tpu.assume_multiple %12, 32 : i32
    %14 = arith.index_cast %13 : i32 to index
    %c0_11 = arith.constant 0 : index
    %15 = vector.load %arg1[%14, %c0_11] : memref<128x128xf32, #tpu.memory_space<vmem>>, vector<32x128xf32>
    %16 = arith.truncf %15 : vector<32x128xf32> to vector<32x128xbf16>
    %cst = arith.constant dense<0.000000e+00> : vector<32x128xf32>
    %17 = tpu.matmul %16, %0, %cst {dimension_numbers = #tpu.dot_dimension_numbers<[1], [0], [0], [1], [0, 0, 1, 1], [], []>} : vector<32x128xbf16>, vector<128x128xbf16>, vector<32x128xf32> -> vector<32x128xf32>
    %18 = arith.addf %17, %5 : vector<32x128xf32>
    %19 = arith.truncf %18 : vector<32x128xf32> to vector<32x128xbf16>
    %20 = math.tanh %19 : vector<32x128xbf16>
    %cst_12 = arith.constant dense<0.000000e+00> : vector<32x128xf32>
    %21 = tpu.matmul %20, %1, %cst_12 {dimension_numbers = #tpu.dot_dimension_numbers<[1], [0], [0], [1], [0, 0, 1, 1], [], []>} : vector<32x128xbf16>, vector<128x128xbf16>, vector<32x128xf32> -> vector<32x128xf32>
    %22 = arith.addf %21, %8 : vector<32x128xf32>
    %23 = arith.truncf %22 : vector<32x128xf32> to vector<32x128xbf16>
    %24 = math.tanh %23 : vector<32x128xbf16>
    %cst_13 = arith.constant dense<0.000000e+00> : vector<32x128xf32>
    %25 = tpu.matmul %24, %2, %cst_13 {dimension_numbers = #tpu.dot_dimension_numbers<[1], [0], [0], [1], [0, 0, 1, 1], [], []>} : vector<32x128xbf16>, vector<128x128xbf16>, vector<32x128xf32> -> vector<32x128xf32>
    %26 = arith.addf %25, %11 : vector<32x128xf32>
    %27 = arith.index_cast %13 : i32 to index
    %c0_14 = arith.constant 0 : index
    %28 = vector.load %arg8[%27, %c0_14] : memref<128x128xf32, #tpu.memory_space<vmem>>, vector<32x128xf32>
    tpu.vector_store %arg8[%27, %c0_14], %26 {strides = array<i32>} : memref<128x128xf32, #tpu.memory_space<vmem>>, vector<32x128xf32>,
    %c1_i32 = arith.constant 1 : i32
    %c32_i32_15 = arith.constant 32 : i32
    %29 = arith.muli %c1_i32, %c32_i32_15 : i32
    %30 = tpu.assume_multiple %29, 32 : i32
    %31 = arith.index_cast %30 : i32 to index
    %c0_16 = arith.constant 0 : index
    %32 = vector.load %arg1[%31, %c0_16] : memref<128x128xf32, #tpu.memory_space<vmem>>, vector<32x128xf32>
    %33 = arith.truncf %32 : vector<32x128xf32> to vector<32x128xbf16>
    %cst_17 = arith.constant dense<0.000000e+00> : vector<32x128xf32>
    %34 = tpu.matmul %33, %0, %cst_17 {dimension_numbers = #tpu.dot_dimension_numbers<[1], [0], [0], [1], [0, 0, 1, 1], [], []>} : vector<32x128xbf16>, vector<128x128xbf16>, vector<32x128xf32> -> vector<32x128xf32>
    %35 = arith.addf %34, %5 : vector<32x128xf32>
    %36 = arith.truncf %35 : vector<32x128xf32> to vector<32x128xbf16>
    %37 = math.tanh %36 : vector<32x128xbf16>
    %cst_18 = arith.constant dense<0.000000e+00> : vector<32x128xf32>
    %38 = tpu.matmul %37, %1, %cst_18 {dimension_numbers = #tpu.dot_dimension_numbers<[1], [0], [0], [1], [0, 0, 1, 1], [], []>} : vector<32x128xbf16>, vector<128x128xbf16>, vector<32x128xf32> -> vector<32x128xf32>
    %39 = arith.addf %38, %8 : vector<32x128xf32>
    %40 = arith.truncf %39 : vector<32x128xf32> to vector<32x128xbf16>
    %41 = math.tanh %40 : vector<32x128xbf16>
    %cst_19 = arith.constant dense<0.000000e+00> : vector<32x128xf32>
    %42 = tpu.matmul %41, %2, %cst_19 {dimension_numbers = #tpu.dot_dimension_numbers<[1], [0], [0], [1], [0, 0, 1, 1], [], []>} : vector<32x128xbf16>, vector<128x128xbf16>, vector<32x128xf32> -> vector<32x128xf32>
    %43 = arith.addf %42, %11 : vector<32x128xf32>
    %44 = arith.index_cast %30 : i32 to index
    %c0_20 = arith.constant 0 : index
    %45 = vector.load %arg8[%44, %c0_20] : memref<128x128xf32, #tpu.memory_space<vmem>>, vector<32x128xf32>
    tpu.vector_store %arg8[%44, %c0_20], %43 {strides = array<i32>} : memref<128x128xf32, #tpu.memory_space<vmem>>, vector<32x128xf32>,
    %c2_i32 = arith.constant 2 : i32
    %c32_i32_21 = arith.constant 32 : i32
    %46 = arith.muli %c2_i32, %c32_i32_21 : i32
    %47 = tpu.assume_multiple %46, 32 : i32
    %48 = arith.index_cast %47 : i32 to index
    %c0_22 = arith.constant 0 : index
    %49 = vector.load %arg1[%48, %c0_22] : memref<128x128xf32, #tpu.memory_space<vmem>>, vector<32x128xf32>
    %50 = arith.truncf %49 : vector<32x128xf32> to vector<32x128xbf16>
    %cst_23 = arith.constant dense<0.000000e+00> : vector<32x128xf32>
    %51 = tpu.matmul %50, %0, %cst_23 {dimension_numbers = #tpu.dot_dimension_numbers<[1], [0], [0], [1], [0, 0, 1, 1], [], []>} : vector<32x128xbf16>, vector<128x128xbf16>, vector<32x128xf32> -> vector<32x128xf32>
    %52 = arith.addf %51, %5 : vector<32x128xf32>
    %53 = arith.truncf %52 : vector<32x128xf32> to vector<32x128xbf16>
    %54 = math.tanh %53 : vector<32x128xbf16>
    %cst_24 = arith.constant dense<0.000000e+00> : vector<32x128xf32>
    %55 = tpu.matmul %54, %1, %cst_24 {dimension_numbers = #tpu.dot_dimension_numbers<[1], [0], [0], [1], [0, 0, 1, 1], [], []>} : vector<32x128xbf16>, vector<128x128xbf16>, vector<32x128xf32> -> vector<32x128xf32>
    %56 = arith.addf %55, %8 : vector<32x128xf32>
    %57 = arith.truncf %56 : vector<32x128xf32> to vector<32x128xbf16>
    %58 = math.tanh %57 : vector<32x128xbf16>
    %cst_25 = arith.constant dense<0.000000e+00> : vector<32x128xf32>
    %59 = tpu.matmul %58, %2, %cst_25 {dimension_numbers = #tpu.dot_dimension_numbers<[1], [0], [0], [1], [0, 0, 1, 1], [], []>} : vector<32x128xbf16>, vector<128x128xbf16>, vector<32x128xf32> -> vector<32x128xf32>
    %60 = arith.addf %59, %11 : vector<32x128xf32>
    %61 = arith.index_cast %47 : i32 to index
    %c0_26 = arith.constant 0 : index
    %62 = vector.load %arg8[%61, %c0_26] : memref<128x128xf32, #tpu.memory_space<vmem>>, vector<32x128xf32>
    tpu.vector_store %arg8[%61, %c0_26], %60 {strides = array<i32>} : memref<128x128xf32, #tpu.memory_space<vmem>>, vector<32x128xf32>,
    %c3_i32 = arith.constant 3 : i32
    %c32_i32_27 = arith.constant 32 : i32
    %63 = arith.muli %c3_i32, %c32_i32_27 : i32
    %64 = tpu.assume_multiple %63, 32 : i32
    %65 = arith.index_cast %64 : i32 to index
    %c0_28 = arith.constant 0 : index
    %66 = vector.load %arg1[%65, %c0_28] : memref<128x128xf32, #tpu.memory_space<vmem>>, vector<32x128xf32>
    %67 = arith.truncf %66 : vector<32x128xf32> to vector<32x128xbf16>
    %cst_29 = arith.constant dense<0.000000e+00> : vector<32x128xf32>
    %68 = tpu.matmul %67, %0, %cst_29 {dimension_numbers = #tpu.dot_dimension_numbers<[1], [0], [0], [1], [0, 0, 1, 1], [], []>} : vector<32x128xbf16>, vector<128x128xbf16>, vector<32x128xf32> -> vector<32x128xf32>
    %69 = arith.addf %68, %5 : vector<32x128xf32>
    %70 = arith.truncf %69 : vector<32x128xf32> to vector<32x128xbf16>
    %71 = math.tanh %70 : vector<32x128xbf16>
    %cst_30 = arith.constant dense<0.000000e+00> : vector<32x128xf32>
    %72 = tpu.matmul %71, %1, %cst_30 {dimension_numbers = #tpu.dot_dimension_numbers<[1], [0], [0], [1], [0, 0, 1, 1], [], []>} : vector<32x128xbf16>, vector<128x128xbf16>, vector<32x128xf32> -> vector<32x128xf32>
    %73 = arith.addf %72, %8 : vector<32x128xf32>
    %74 = arith.truncf %73 : vector<32x128xf32> to vector<32x128xbf16>
    %75 = math.tanh %74 : vector<32x128xbf16>
    %cst_31 = arith.constant dense<0.000000e+00> : vector<32x128xf32>
    %76 = tpu.matmul %75, %2, %cst_31 {dimension_numbers = #tpu.dot_dimension_numbers<[1], [0], [0], [1], [0, 0, 1, 1], [], []>} : vector<32x128xbf16>, vector<128x128xbf16>, vector<32x128xf32> -> vector<32x128xf32>
    %77 = arith.addf %76, %11 : vector<32x128xf32>
    %78 = arith.index_cast %64 : i32 to index
    %c0_32 = arith.constant 0 : index
    %79 = vector.load %arg8[%78, %c0_32] : memref<128x128xf32, #tpu.memory_space<vmem>>, vector<32x128xf32>
    tpu.vector_store %arg8[%78, %c0_32], %77 {strides = array<i32>} : memref<128x128xf32, #tpu.memory_space<vmem>>, vector<32x128xf32>,
    %c4_i32 = arith.constant 4 : i32
    return
  }
  func.func @transform_0(%arg0: i32) -> (i32, i32) {
    %c0_i32 = arith.constant 0 : i32
    %c0_i32_0 = arith.constant 0 : i32
    return %arg0, %c0_i32 : i32, i32
  }
  func.func @transform_1(%arg0: i32) -> (i32, i32) {
    %c0_i32 = arith.constant 0 : i32
    %c0_i32_0 = arith.constant 0 : i32
    %c0_i32_1 = arith.constant 0 : i32
    return %c0_i32, %c0_i32_0 : i32, i32
  }
  func.func @transform_2(%arg0: i32) -> (i32, i32) {
    %c0_i32 = arith.constant 0 : i32
    %c0_i32_0 = arith.constant 0 : i32
    %c0_i32_1 = arith.constant 0 : i32
    return %c0_i32, %c0_i32_0 : i32, i32
  }
  func.func @transform_3(%arg0: i32) -> (i32, i32) {
    %c0_i32 = arith.constant 0 : i32
    %c0_i32_0 = arith.constant 0 : i32
    %c0_i32_1 = arith.constant 0 : i32
    return %c0_i32, %c0_i32_0 : i32, i32
  }
  func.func @transform_4(%arg0: i32) -> (i32, i32) {
    %c0_i32 = arith.constant 0 : i32
    %c0_i32_0 = arith.constant 0 : i32
    %c0_i32_1 = arith.constant 0 : i32
    return %c0_i32, %c0_i32_0 : i32, i32
  }
  func.func @transform_5(%arg0: i32) -> (i32, i32) {
    %c0_i32 = arith.constant 0 : i32
    %c0_i32_0 = arith.constant 0 : i32
    %c0_i32_1 = arith.constant 0 : i32
    return %c0_i32, %c0_i32_0 : i32, i32
  }
  func.func @transform_6(%arg0: i32) -> (i32, i32) {
    %c0_i32 = arith.constant 0 : i32
    %c0_i32_0 = arith.constant 0 : i32
    %c0_i32_1 = arith.constant 0 : i32
    return %c0_i32, %c0_i32_0 : i32, i32
  }
  func.func @transform_7(%arg0: i32) -> (i32, i32) {
    %c0_i32 = arith.constant 0 : i32
    %c0_i32_0 = arith.constant 0 : i32
    return %arg0, %c0_i32 : i32, i32
  }
}

</mosaic_0001>

<llo_original>
// kernel: discrete_mmp_forward.1
$region0: #{discrete_mmp_forward.1}
  #allocation0 [shape = 'u32[]', space=smem, size = 0x4, offset = 0x4, fixed_abs, tag = 'smem constant byte address 0x4 - core index']
  #allocation1 [shape = 'u32[144,128]{1,0:T(1,128)}', space=vmem, size = 0x12000, scoped, tag = 'internal scratch']
  %s0 = inlined_call_operand.vmem [shape: f32[256,128], index: 0, kind: input, shape index: {}]
  %s1 = inlined_call_operand.vmem [shape: bf16[128,128], index: 1, kind: input, shape index: {}]
  %s2 = inlined_call_operand.vmem [shape: f32[1,128], index: 2, kind: input, shape index: {}]
  %s3 = inlined_call_operand.vmem [shape: bf16[128,128], index: 3, kind: input, shape index: {}]
  %s4 = inlined_call_operand.vmem [shape: f32[1,128], index: 4, kind: input, shape index: {}]
  %s5 = inlined_call_operand.vmem [shape: bf16[128,128], index: 5, kind: input, shape index: {}]
  %s6 = inlined_call_operand.vmem [shape: f32[1,128], index: 6, kind: input, shape index: {}]
  %s7 = inlined_call_operand.vmem [shape: f32[256,128], index: 7, kind: output, shape index: {}]
  %s8 = sld [smem:[#allocation0]]
  $region61: #{discrete_mmp_forward.1} parent=0
    _
  %s10 = ssub.s32 1, %s8
  %s11 = scalar_select 0, %s10, %s8
  loop: start=0, step=1, limit=4
  $region2: #{discrete_mmp_forward.1} parent=0 // loop_pre_header
    _
  $region3: #{discrete_mmp_forward.1} parent=0 // loop_header
    %s13 = sphi 0, %s17
    %p14 = scmp.ge.s32.totalorder %s13, 4
    %s23 = sphi 0, %s25
    %s26 = sphi 0, %s23
    %s27 = sphi 0, %s26
    %s43 = sphi 0, %s27
    %s47 = sphi 0, %s47
    %s49 = sphi 0, %s47
    %s50 = sphi 0, %s49
    %s64 = sphi 0, %s50
    %s68 = sphi 0, %s68
    %s70 = sphi 0, %s68
    %s71 = sphi 0, %s70
    %s85 = sphi 0, %s71
    %s89 = sphi 0, %s89
    %s91 = sphi 0, %s89
    %s92 = sphi 0, %s91
    %s106 = sphi 0, %s92
    %s110 = sphi 0, %s110
    %s112 = sphi 0, %s110
    %s113 = sphi 0, %s112
    %s127 = sphi 0, %s113
    %s131 = sphi 0, %s131
    %s133 = sphi 0, %s131
    %s134 = sphi 0, %s133
    %s148 = sphi 0, %s134
    %s152 = sphi 0, %s152
    %s154 = sphi 0, %s152
    %s155 = sphi 0, %s154
    %s169 = sphi 0, %s155
    %s175 = sphi 0, %s177
    %s178 = sphi 0, %s175
    %s179 = sphi 0, %s178
    %s195 = sphi 0, %s179
  $region4: #{discrete_mmp_forward.1} parent=0 // loop_header_branch
    %16 = sbr.rel (%p14) target = $region8
  $region5: #{discrete_mmp_forward.1} parent=0 // loop_body
    %s18 = ssub.s32 %s13, 1
    %s19 = ssub.s32 %s13, 2
    %s20 = sadd.s32 %s13, 1
    %s21 = ssub.s32 %s13, %s20
    %p22 = scmp.eq.s32.totalorder %s21, 0
    %s24 = sadd.s32 %s23, 1
    %s25 = scalar_select %p22, %s23, %s24
    %p28 = pneg %p22
    %p29 = scmp.eq.s32.totalorder %s13, 1
    %p30 = por %p28, %p29
    %p31 = scmp.ne.s32.totalorder %s23, %s26
    %p32 = scmp.eq.s32.totalorder %s13, 0
    %p33 = por %p31, %p32
    %p34 = scmp.ne.s32.totalorder %s23, %s26
    %p35 = scmp.eq.s32.totalorder %s18, 1
    %p36 = por %p34, %p35
    %p37 = scmp.ne.s32.totalorder %s26, %s27
    %p38 = scmp.eq.s32.totalorder %s18, 0
    %p39 = por %p37, %p38
    %p40 = scmp.ne.s32.totalorder %s26, %s27
    %p41 = scmp.eq.s32.totalorder %s19, 1
    %p42 = por %p40, %p41
    %p44 = scmp.ne.s32.totalorder %s27, %s43
    %p45 = scmp.eq.s32.totalorder %s19, 0
    %p46 = por %p44, %p45
    %s48 = sadd.s32 %s47, 1
    %p51 = scmp.eq.s32.totalorder %s13, 1
    %p52 = scmp.ne.s32.totalorder %s47, %s49
    %p53 = scmp.eq.s32.totalorder %s13, 0
    %p54 = por %p52, %p53
    %p55 = scmp.ne.s32.totalorder %s47, %s49
    %p56 = scmp.eq.s32.totalorder %s18, 1
    %p57 = por %p55, %p56
    %p58 = scmp.ne.s32.totalorder %s49, %s50
    %p59 = scmp.eq.s32.totalorder %s18, 0
    %p60 = por %p58, %p59
    %p61 = scmp.ne.s32.totalorder %s49, %s50
    %p62 = scmp.eq.s32.totalorder %s19, 1
    %p63 = por %p61, %p62
    %p65 = scmp.ne.s32.totalorder %s50, %s64
    %p66 = scmp.eq.s32.totalorder %s19, 0
    %p67 = por %p65, %p66
    %s69 = sadd.s32 %s68, 1
    %p72 = scmp.eq.s32.totalorder %s13, 1
    %p73 = scmp.ne.s32.totalorder %s68, %s70
    %p74 = scmp.eq.s32.totalorder %s13, 0
    %p75 = por %p73, %p74
    %p76 = scmp.ne.s32.totalorder %s68, %s70
    %p77 = scmp.eq.s32.totalorder %s18, 1
    %p78 = por %p76, %p77
    %p79 = scmp.ne.s32.totalorder %s70, %s71
    %p80 = scmp.eq.s32.totalorder %s18, 0
    %p81 = por %p79, %p80
    %p82 = scmp.ne.s32.totalorder %s70, %s71
    %p83 = scmp.eq.s32.totalorder %s19, 1
    %p84 = por %p82, %p83
    %p86 = scmp.ne.s32.totalorder %s71, %s85
    %p87 = scmp.eq.s32.totalorder %s19, 0
    %p88 = por %p86, %p87
    %s90 = sadd.s32 %s89, 1
    %p93 = scmp.eq.s32.totalorder %s13, 1
    %p94 = scmp.ne.s32.totalorder %s89, %s91
    %p95 = scmp.eq.s32.totalorder %s13, 0
    %p96 = por %p94, %p95
    %p97 = scmp.ne.s32.totalorder %s89, %s91
    %p98 = scmp.eq.s32.totalorder %s18, 1
    %p99 = por %p97, %p98
    %p100 = scmp.ne.s32.totalorder %s91, %s92
    %p101 = scmp.eq.s32.totalorder %s18, 0
    %p102 = por %p100, %p101
    %p103 = scmp.ne.s32.totalorder %s91, %s92
    %p104 = scmp.eq.s32.totalorder %s19, 1
    %p105 = por %p103, %p104
    %p107 = scmp.ne.s32.totalorder %s92, %s106
    %p108 = scmp.eq.s32.totalorder %s19, 0
    %p109 = por %p107, %p108
    %s111 = sadd.s32 %s110, 1
    %p114 = scmp.eq.s32.totalorder %s13, 1
    %p115 = scmp.ne.s32.totalorder %s110, %s112
    %p116 = scmp.eq.s32.totalorder %s13, 0
    %p117 = por %p115, %p116
    %p118 = scmp.ne.s32.totalorder %s110, %s112
    %p119 = scmp.eq.s32.totalorder %s18, 1
    %p120 = por %p118, %p119
    %p121 = scmp.ne.s32.totalorder %s112, %s113
    %p122 = scmp.eq.s32.totalorder %s18, 0
    %p123 = por %p121, %p122
    %p124 = scmp.ne.s32.totalorder %s112, %s113
    %p125 = scmp.eq.s32.totalorder %s19, 1
    %p126 = por %p124, %p125
    %p128 = scmp.ne.s32.totalorder %s113, %s127
    %p129 = scmp.eq.s32.totalorder %s19, 0
    %p130 = por %p128, %p129
    %s132 = sadd.s32 %s131, 1
    %p135 = scmp.eq.s32.totalorder %s13, 1
    %p136 = scmp.ne.s32.totalorder %s131, %s133
    %p137 = scmp.eq.s32.totalorder %s13, 0
    %p138 = por %p136, %p137
    %p139 = scmp.ne.s32.totalorder %s131, %s133
    %p140 = scmp.eq.s32.totalorder %s18, 1
    %p141 = por %p139, %p140
    %p142 = scmp.ne.s32.totalorder %s133, %s134
    %p143 = scmp.eq.s32.totalorder %s18, 0
    %p144 = por %p142, %p143
    %p145 = scmp.ne.s32.totalorder %s133, %s134
    %p146 = scmp.eq.s32.totalorder %s19, 1
    %p147 = por %p145, %p146
    %p149 = scmp.ne.s32.totalorder %s134, %s148
    %p150 = scmp.eq.s32.totalorder %s19, 0
    %p151 = por %p149, %p150
    %s153 = sadd.s32 %s152, 1
    %p156 = scmp.eq.s32.totalorder %s13, 1
    %p157 = scmp.ne.s32.totalorder %s152, %s154
    %p158 = scmp.eq.s32.totalorder %s13, 0
    %p159 = por %p157, %p158
    %p160 = scmp.ne.s32.totalorder %s152, %s154
    %p161 = scmp.eq.s32.totalorder %s18, 1
    %p162 = por %p160, %p161
    %p163 = scmp.ne.s32.totalorder %s154, %s155
    %p164 = scmp.eq.s32.totalorder %s18, 0
    %p165 = por %p163, %p164
    %p166 = scmp.ne.s32.totalorder %s154, %s155
    %p167 = scmp.eq.s32.totalorder %s19, 1
    %p168 = por %p166, %p167
    %p170 = scmp.ne.s32.totalorder %s155, %s169
    %p171 = scmp.eq.s32.totalorder %s19, 0
    %p172 = por %p170, %p171
    %s173 = ssub.s32 %s13, %s20
    %p174 = scmp.eq.s32.totalorder %s173, 0
    %s176 = sadd.s32 %s175, 1
    %s177 = scalar_select %p174, %s175, %s176
    %p180 = pneg %p174
    %p181 = scmp.eq.s32.totalorder %s13, 1
    %p182 = por %p180, %p181
    %p183 = scmp.ne.s32.totalorder %s175, %s178
    %p184 = scmp.eq.s32.totalorder %s13, 0
    %p185 = por %p183, %p184
    %p186 = scmp.ne.s32.totalorder %s175, %s178
    %p187 = scmp.eq.s32.totalorder %s18, 1
    %p188 = por %p186, %p187
    %p189 = scmp.ne.s32.totalorder %s178, %s179
    %p190 = scmp.eq.s32.totalorder %s18, 0
    %p191 = por %p189, %p190
    %p192 = scmp.ne.s32.totalorder %s178, %s179
    %p193 = scmp.eq.s32.totalorder %s19, 1
    %p194 = por %p192, %p193
    %p196 = scmp.ne.s32.totalorder %s179, %s195
    %p197 = scmp.eq.s32.totalorder %s19, 0
    %p198 = por %p196, %p197
    %p199 = scmp.le.s32.totalorder 1, %s13
    %p200 = scmp.lt.s32.totalorder %s13, 3
    %p201 = pnand %p199, %p200
    %p202 = pneg %p201
    // Predicated region
    $region9: #{discrete_mmp_forward.1} parent=5 // pred_check
      _
    $region10: #{discrete_mmp_forward.1} parent=5 // pred_check_branch
      %204 = sbr.rel (%p201) target = $region12
    $region11: #{discrete_mmp_forward.1} parent=5 // pred_region
      %s205 = ssub.s32 %s13, 1
      // Predicated region
      $region13: #{discrete_mmp_forward.1} parent=11 // pred_check
        %p206 = pneg %p60
      $region14: #{discrete_mmp_forward.1} parent=11 // pred_check_branch
        %208 = sbr.rel (%p206) target = $region16
      $region15: #{discrete_mmp_forward.1} parent=11 // pred_region
        _
      $region16: #{discrete_mmp_forward.1} parent=11 // pred_fallthru
        _
      // Predicated region
      $region17: #{discrete_mmp_forward.1} parent=11 // pred_check
        %p209 = pneg %p81
      $region18: #{discrete_mmp_forward.1} parent=11 // pred_check_branch
        %211 = sbr.rel (%p209) target = $region20
      $region19: #{discrete_mmp_forward.1} parent=11 // pred_region
        _
      $region20: #{discrete_mmp_forward.1} parent=11 // pred_fallthru
        _
      // Predicated region
      $region21: #{discrete_mmp_forward.1} parent=11 // pred_check
        %p212 = pneg %p102
      $region22: #{discrete_mmp_forward.1} parent=11 // pred_check_branch
        %214 = sbr.rel (%p212) target = $region24
      $region23: #{discrete_mmp_forward.1} parent=11 // pred_region
        _
      $region24: #{discrete_mmp_forward.1} parent=11 // pred_fallthru
        _
      // Predicated region
      $region25: #{discrete_mmp_forward.1} parent=11 // pred_check
        %p215 = pneg %p123
      $region26: #{discrete_mmp_forward.1} parent=11 // pred_check_branch
        %217 = sbr.rel (%p215) target = $region28
      $region27: #{discrete_mmp_forward.1} parent=11 // pred_region
        _
      $region28: #{discrete_mmp_forward.1} parent=11 // pred_fallthru
        _
      // Predicated region
      $region29: #{discrete_mmp_forward.1} parent=11 // pred_check
        %p218 = pneg %p144
      $region30: #{discrete_mmp_forward.1} parent=11 // pred_check_branch
        %220 = sbr.rel (%p218) target = $region32
      $region31: #{discrete_mmp_forward.1} parent=11 // pred_region
        _
      $region32: #{discrete_mmp_forward.1} parent=11 // pred_fallthru
        _
      // Predicated region
      $region33: #{discrete_mmp_forward.1} parent=11 // pred_check
        %p221 = pneg %p165
      $region34: #{discrete_mmp_forward.1} parent=11 // pred_check_branch
        %223 = sbr.rel (%p221) target = $region36
      $region35: #{discrete_mmp_forward.1} parent=11 // pred_region
        _
      $region36: #{discrete_mmp_forward.1} parent=11 // pred_fallthru
        _
    $region12: #{discrete_mmp_forward.1} parent=5 // pred_fallthru
      _
    %p224 = scmp.lt.s32.totalorder %s13, 2
    // Predicated region
    $region37: #{discrete_mmp_forward.1} parent=5 // pred_check
      %p225 = pneg %p224
    $region38: #{discrete_mmp_forward.1} parent=5 // pred_check_branch
      %227 = sbr.rel (%p225) target = $region40
    $region39: #{discrete_mmp_forward.1} parent=5 // pred_region
      // Predicated region
      $region41: #{discrete_mmp_forward.1} parent=39 // pred_check
        %p228 = pneg %p33
      $region42: #{discrete_mmp_forward.1} parent=39 // pred_check_branch
        %230 = sbr.rel (%p228) target = $region44
      $region43: #{discrete_mmp_forward.1} parent=39 // pred_region
        %s231 = smul.u32 16, %s13
        %p232 = scmp.lt.s32.totalorder %s231, 31
        %s233 = scalar_select %p232, %s231, 31
        %s234 = smul.addr %s233, 8
        %s235 = scalar_lea.vmem %s0, %s234
        %s236 = smul.u32 16, %s13
      $region44: #{discrete_mmp_forward.1} parent=39 // pred_fallthru
        _
    $region40: #{discrete_mmp_forward.1} parent=5 // pred_fallthru
      _
    %p237 = scmp.le.s32.totalorder 1, %s13
    %p238 = scmp.lt.s32.totalorder %s13, 3
    %p239 = pnand %p237, %p238
    %p240 = pneg %p239
    // Predicated region
    $region45: #{discrete_mmp_forward.1} parent=5 // pred_check
      _
    $region46: #{discrete_mmp_forward.1} parent=5 // pred_check_branch
      %242 = sbr.rel (%p239) target = $region48
    $region47: #{discrete_mmp_forward.1} parent=5 // pred_region
      %s243 = ssub.s32 %s13, 1
      %s244 = smul.u32 16, %s18
      %p245 = scmp.lt.s32.totalorder %s244, 31
      %s246 = scalar_select %p245, %s244, 31
      %s247 = smul.addr %s246, 8
      %s248 = scalar_lea.vmem %s0, %s247
      %p249 = pneg %p39
      %p250 = pneg %p36
      %p251 = pneg %p60
      %p252 = pneg %p57
      %p253 = pneg %p81
      %p254 = pneg %p78
      %p255 = pneg %p102
      %p256 = pneg %p99
      %p257 = pneg %p123
      %p258 = pneg %p120
      %p259 = pneg %p144
      %p260 = pneg %p141
      %p261 = pneg %p165
      %p262 = pneg %p162
      %p263 = pneg %p191
      %p264 = pneg %p188
      %s265 = smul.u32 16, %s18
      %p266 = scmp.lt.s32.totalorder %s265, 31
      %s267 = scalar_select %p266, %s265, 31
      %s268 = smul.addr %s267, 8
      %s269 = scalar_lea.vmem %s7, %s268
      %s270 = smul.u32 16, %s18
      %p271 = scmp.lt.s32.totalorder %s270, 31
      %s272 = scalar_select %p271, %s270, 31
      %s273 = smul.addr %s272, 8
      %s274 = scalar_lea.vmem %s0, %s273
      %s275 = smul.u32 16, %s18
      %s276 = smul.u32 16, %s18
      %p277 = scmp.lt.s32.totalorder %s276, 31
      %s278 = scalar_select %p277, %s276, 31
      %s279 = smul.addr %s278, 8
      %s280 = scalar_lea.vmem %s7, %s279
      %s281 = smul.u32 16, %s18
      %v283 = vld [vmem:[%s1] sm:$0xf]
      %v284 = vld [vmem:[%s1 + $0x4] sm:$0xf]
      %v285 = vld [vmem:[%s1 + $0x8] sm:$0xf]
      %v286 = vld [vmem:[%s1 + $0xc] sm:$0xf]
      %v287 = vld [vmem:[%s1 + $0x10] sm:$0xf]
      %v288 = vld [vmem:[%s1 + $0x14] sm:$0xf]
      %v289 = vld [vmem:[%s1 + $0x18] sm:$0xf]
      %v290 = vld [vmem:[%s1 + $0x1c] sm:$0xf]
      %v291 = vld [vmem:[%s1 + $0x20] sm:$0xf]
      %v292 = vld [vmem:[%s1 + $0x24] sm:$0xf]
      %v293 = vld [vmem:[%s1 + $0x28] sm:$0xf]
      %v294 = vld [vmem:[%s1 + $0x2c] sm:$0xf]
      %v295 = vld [vmem:[%s1 + $0x30] sm:$0xf]
      %v296 = vld [vmem:[%s1 + $0x34] sm:$0xf]
      %v297 = vld [vmem:[%s1 + $0x38] sm:$0xf]
      %v298 = vld [vmem:[%s1 + $0x3c] sm:$0xf]
      %v299 = vld [vmem:[%s3] sm:$0xf]
      %v300 = vld [vmem:[%s3 + $0x4] sm:$0xf]
      %v301 = vld [vmem:[%s3 + $0x8] sm:$0xf]
      %v302 = vld [vmem:[%s3 + $0xc] sm:$0xf]
      %v303 = vld [vmem:[%s3 + $0x10] sm:$0xf]
      %v304 = vld [vmem:[%s3 + $0x14] sm:$0xf]
      %v305 = vld [vmem:[%s3 + $0x18] sm:$0xf]
      %v306 = vld [vmem:[%s3 + $0x1c] sm:$0xf]
      %v307 = vld [vmem:[%s3 + $0x20] sm:$0xf]
      %v308 = vld [vmem:[%s3 + $0x24] sm:$0xf]
      %v309 = vld [vmem:[%s3 + $0x28] sm:$0xf]
      %v310 = vld [vmem:[%s3 + $0x2c] sm:$0xf]
      %v311 = vld [vmem:[%s3 + $0x30] sm:$0xf]
      %v312 = vld [vmem:[%s3 + $0x34] sm:$0xf]
      %v313 = vld [vmem:[%s3 + $0x38] sm:$0xf]
      %v314 = vld [vmem:[%s3 + $0x3c] sm:$0xf]
      %v315 = vld [vmem:[%s5] sm:$0xf]
      %v316 = vld [vmem:[%s5 + $0x4] sm:$0xf]
      %v317 = vld [vmem:[%s5 + $0x8] sm:$0xf]
      %v318 = vld [vmem:[%s5 + $0xc] sm:$0xf]
      %v319 = vld [vmem:[%s5 + $0x10] sm:$0xf]
      %v320 = vld [vmem:[%s5 + $0x14] sm:$0xf]
      %v321 = vld [vmem:[%s5 + $0x18] sm:$0xf]
      %v322 = vld [vmem:[%s5 + $0x1c] sm:$0xf]
      %v323 = vld [vmem:[%s5 + $0x20] sm:$0xf]
      %v324 = vld [vmem:[%s5 + $0x24] sm:$0xf]
      %v325 = vld [vmem:[%s5 + $0x28] sm:$0xf]
      %v326 = vld [vmem:[%s5 + $0x2c] sm:$0xf]
      %v327 = vld [vmem:[%s5 + $0x30] sm:$0xf]
      %v328 = vld [vmem:[%s5 + $0x34] sm:$0xf]
      %v329 = vld [vmem:[%s5 + $0x38] sm:$0xf]
      %v330 = vld [vmem:[%s5 + $0x3c] sm:$0xf]
      %v331 = vld [vmem:[%s2] sm:$0x1]
      %v333 = vlaneseq
      %v334 = vshrl.u32 %v333, 7
      %v335 = vsub.s32 0, %v334
      %v336 = vrot.slane %v331, %v335
      %v338 = vld [vmem:[%s4] sm:$0x1]
      %v340 = vlaneseq
      %v341 = vshrl.u32 %v340, 7
      %v342 = vsub.s32 0, %v341
      %v343 = vrot.slane %v338, %v342
      %v345 = vld [vmem:[%s6] sm:$0x1]
      %v347 = vlaneseq
      %v348 = vshrl.u32 %v347, 7
      %v349 = vsub.s32 0, %v348
      %v350 = vrot.slane %v345, %v349
      %v352 = vld [vmem:[%s274] sm:$0xff]
      %v353 = vld [vmem:[%s274 + $0x8] sm:$0xff]
      %v354 = vld [vmem:[%s274 + $0x10] sm:$0xff]
      %v355 = vld [vmem:[%s274 + $0x18] sm:$0xff]
      %v356 = vpack.c.bf16 %v353, %v352
      %v357 = vpack.c.bf16 %v355, %v354
      %v374 = vunpack.c.l.b16 %v283
      %v375 = vunpack.c.l.b16 %v284
      %v376 = vunpack.c.l.b16 %v285
      %v377 = vunpack.c.l.b16 %v286
      %v378 = vunpack.c.l.b16 %v287
      %v379 = vunpack.c.l.b16 %v288
      %v380 = vunpack.c.l.b16 %v289
      %v381 = vunpack.c.l.b16 %v290
      %v382 = vunpack.c.l.b16 %v291
      %v383 = vunpack.c.l.b16 %v292
      %v384 = vunpack.c.l.b16 %v293
      %v385 = vunpack.c.l.b16 %v294
      %v386 = vunpack.c.l.b16 %v295
      %v387 = vunpack.c.l.b16 %v296
      %v388 = vunpack.c.l.b16 %v297
      %v389 = vunpack.c.l.b16 %v298
      %v390 = vpack.c.b16 %v375, %v374
      %v391 = vpack.c.b16 %v377, %v376
      %v392 = vpack.c.b16 %v379, %v378
      %v393 = vpack.c.b16 %v381, %v380
      %v394 = vpack.c.b16 %v383, %v382
      %v395 = vpack.c.b16 %v385, %v384
      %v396 = vpack.c.b16 %v387, %v386
      %v397 = vpack.c.b16 %v389, %v388
      %406 = vmatprep.subr.bf16.mxu0 0
      %407 = vmatpush1.bf16.msra.mxu0 %v390
      %408 = vmatprep.subr.bf16.mxu0 0
      %409 = vmatpush1.bf16.msra.mxu0 %v391
      %410 = vmatprep.subr.bf16.mxu0 0
      %411 = vmatpush1.bf16.msra.mxu0 %v392
      %412 = vmatprep.subr.bf16.mxu0 0
      %413 = vmatpush1.bf16.msra.mxu0 %v393
      %414 = vmatprep.subr.bf16.mxu0 0
      %415 = vmatpush1.bf16.msra.mxu0 %v394
      %416 = vmatprep.subr.bf16.mxu0 0
      %417 = vmatpush1.bf16.msra.mxu0 %v395
      %418 = vmatprep.subr.bf16.mxu0 0
      %419 = vmatpush1.bf16.msra.mxu0 %v396
      %420 = vmatprep.subr.bf16.mxu0 0
      %421 = vmatpush1.bf16.msra.mxu0 %v397
      %422 = vmatprep.subr.bf16.mxu0 0
      %423 = vmatpush1.bf16.msra.mxu0 0
      %424 = vmatprep.subr.bf16.mxu0 0
      %425 = vmatpush1.bf16.msra.mxu0 0
      %426 = vmatprep.subr.bf16.mxu0 0
      %427 = vmatpush1.bf16.msra.mxu0 0
      %428 = vmatprep.subr.bf16.mxu0 0
      %429 = vmatpush1.bf16.msra.mxu0 0
      %430 = vmatprep.subr.bf16.mxu0 0
      %431 = vmatpush1.bf16.msra.mxu0 0
      %432 = vmatprep.subr.bf16.mxu0 0
      %433 = vmatpush1.bf16.msra.mxu0 0
      %434 = vmatprep.subr.bf16.mxu0 0
      %435 = vmatpush1.bf16.msra.mxu0 0
      %436 = vmatprep.subr.bf16.mxu0 0
      %437 = vmatpush1.bf16.msra.mxu0 0
      %438 = vmatprep.mubr.bf16.mxu0 0
      %439 = vmatmul.mubr.bf16.gmra.mrb[0].mxu0 %v356
      %v440 = vpop.f32.mrb[0].mxu0
      %v441 = vadd.f32 %v336, %v440
      %v442 = vpop.f32.mrb[0].mxu0
      %v443 = vpop.f32.mrb[0].mxu0
      %v444 = vadd.f32 %v336, %v443
      %v445 = vpop.f32.mrb[0].mxu0
      %446 = vmatprep.mubr.bf16.mxu0 0
      %447 = vmatmul.mubr.bf16.gmra.mrb[0].mxu0 %v357
      %v448 = vpop.f32.mrb[0].mxu0
      %v449 = vadd.f32 %v336, %v448
      %v450 = vpop.f32.mrb[0].mxu0
      %v451 = vpop.f32.mrb[0].mxu0
      %v452 = vadd.f32 %v336, %v451
      %v453 = vpop.f32.mrb[0].mxu0
      %454 = vdwg.mxu0
      %v455 = vpack.c.bf16 %v444, %v441
      %v456 = vpack.c.bf16 %v452, %v449
      %v457 = vtanh.bf16.pop %v455
      %v458 = vtanh.bf16.pop %v456
      %v475 = vunpack.c.l.b16 %v299
      %v476 = vunpack.c.l.b16 %v300
      %v477 = vunpack.c.l.b16 %v301
      %v478 = vunpack.c.l.b16 %v302
      %v479 = vunpack.c.l.b16 %v303
      %v480 = vunpack.c.l.b16 %v304
      %v481 = vunpack.c.l.b16 %v305
      %v482 = vunpack.c.l.b16 %v306
      %v483 = vunpack.c.l.b16 %v307
      %v484 = vunpack.c.l.b16 %v308
      %v485 = vunpack.c.l.b16 %v309
      %v486 = vunpack.c.l.b16 %v310
      %v487 = vunpack.c.l.b16 %v311
      %v488 = vunpack.c.l.b16 %v312
      %v489 = vunpack.c.l.b16 %v313
      %v490 = vunpack.c.l.b16 %v314
      %v491 = vpack.c.b16 %v476, %v475
      %v492 = vpack.c.b16 %v478, %v477
      %v493 = vpack.c.b16 %v480, %v479
      %v494 = vpack.c.b16 %v482, %v481
      %v495 = vpack.c.b16 %v484, %v483
      %v496 = vpack.c.b16 %v486, %v485
      %v497 = vpack.c.b16 %v488, %v487
      %v498 = vpack.c.b16 %v490, %v489
      %507 = vmatprep.subr.bf16.mxu0 0
      %508 = vmatpush1.bf16.msra.mxu0 %v491
      %509 = vmatprep.subr.bf16.mxu0 0
      %510 = vmatpush1.bf16.msra.mxu0 %v492
      %511 = vmatprep.subr.bf16.mxu0 0
      %512 = vmatpush1.bf16.msra.mxu0 %v493
      %513 = vmatprep.subr.bf16.mxu0 0
      %514 = vmatpush1.bf16.msra.mxu0 %v494
      %515 = vmatprep.subr.bf16.mxu0 0
      %516 = vmatpush1.bf16.msra.mxu0 %v495
      %517 = vmatprep.subr.bf16.mxu0 0
      %518 = vmatpush1.bf16.msra.mxu0 %v496
      %519 = vmatprep.subr.bf16.mxu0 0
      %520 = vmatpush1.bf16.msra.mxu0 %v497
      %521 = vmatprep.subr.bf16.mxu0 0
      %522 = vmatpush1.bf16.msra.mxu0 %v498
      %523 = vmatprep.subr.bf16.mxu0 0
      %524 = vmatpush1.bf16.msra.mxu0 0
      %525 = vmatprep.subr.bf16.mxu0 0
      %526 = vmatpush1.bf16.msra.mxu0 0
      %527 = vmatprep.subr.bf16.mxu0 0
      %528 = vmatpush1.bf16.msra.mxu0 0
      %529 = vmatprep.subr.bf16.mxu0 0
      %530 = vmatpush1.bf16.msra.mxu0 0
      %531 = vmatprep.subr.bf16.mxu0 0
      %532 = vmatpush1.bf16.msra.mxu0 0
      %533 = vmatprep.subr.bf16.mxu0 0
      %534 = vmatpush1.bf16.msra.mxu0 0
      %535 = vmatprep.subr.bf16.mxu0 0
      %536 = vmatpush1.bf16.msra.mxu0 0
      %537 = vmatprep.subr.bf16.mxu0 0
      %538 = vmatpush1.bf16.msra.mxu0 0
      %539 = vmatprep.mubr.bf16.mxu0 0
      %540 = vmatmul.mubr.bf16.gmra.mrb[0].mxu0 %v457
      %v541 = vpop.f32.mrb[0].mxu0
      %v542 = vadd.f32 %v343, %v541
      %v543 = vpop.f32.mrb[0].mxu0
      %v544 = vpop.f32.mrb[0].mxu0
      %v545 = vadd.f32 %v343, %v544
      %v546 = vpop.f32.mrb[0].mxu0
      %547 = vmatprep.mubr.bf16.mxu0 0
      %548 = vmatmul.mubr.bf16.gmra.mrb[0].mxu0 %v458
      %v549 = vpop.f32.mrb[0].mxu0
      %v550 = vadd.f32 %v343, %v549
      %v551 = vpop.f32.mrb[0].mxu0
      %v552 = vpop.f32.mrb[0].mxu0
      %v553 = vadd.f32 %v343, %v552
      %v554 = vpop.f32.mrb[0].mxu0
      %555 = vdwg.mxu0
      %v556 = vpack.c.bf16 %v545, %v542
      %v557 = vpack.c.bf16 %v553, %v550
      %v558 = vtanh.bf16.pop %v556
      %v559 = vtanh.bf16.pop %v557
      %v576 = vunpack.c.l.b16 %v315
      %v577 = vunpack.c.l.b16 %v316
      %v578 = vunpack.c.l.b16 %v317
      %v579 = vunpack.c.l.b16 %v318
      %v580 = vunpack.c.l.b16 %v319
      %v581 = vunpack.c.l.b16 %v320
      %v582 = vunpack.c.l.b16 %v321
      %v583 = vunpack.c.l.b16 %v322
      %v584 = vunpack.c.l.b16 %v323
      %v585 = vunpack.c.l.b16 %v324
      %v586 = vunpack.c.l.b16 %v325
      %v587 = vunpack.c.l.b16 %v326
      %v588 = vunpack.c.l.b16 %v327
      %v589 = vunpack.c.l.b16 %v328
      %v590 = vunpack.c.l.b16 %v329
      %v591 = vunpack.c.l.b16 %v330
      %v592 = vpack.c.b16 %v577, %v576
      %v593 = vpack.c.b16 %v579, %v578
      %v594 = vpack.c.b16 %v581, %v580
      %v595 = vpack.c.b16 %v583, %v582
      %v596 = vpack.c.b16 %v585, %v584
      %v597 = vpack.c.b16 %v587, %v586
      %v598 = vpack.c.b16 %v589, %v588
      %v599 = vpack.c.b16 %v591, %v590
      %608 = vmatprep.subr.bf16.mxu0 0
      %609 = vmatpush1.bf16.msra.mxu0 %v592
      %610 = vmatprep.subr.bf16.mxu0 0
      %611 = vmatpush1.bf16.msra.mxu0 %v593
      %612 = vmatprep.subr.bf16.mxu0 0
      %613 = vmatpush1.bf16.msra.mxu0 %v594
      %614 = vmatprep.subr.bf16.mxu0 0
      %615 = vmatpush1.bf16.msra.mxu0 %v595
      %616 = vmatprep.subr.bf16.mxu0 0
      %617 = vmatpush1.bf16.msra.mxu0 %v596
      %618 = vmatprep.subr.bf16.mxu0 0
      %619 = vmatpush1.bf16.msra.mxu0 %v597
      %620 = vmatprep.subr.bf16.mxu0 0
      %621 = vmatpush1.bf16.msra.mxu0 %v598
      %622 = vmatprep.subr.bf16.mxu0 0
      %623 = vmatpush1.bf16.msra.mxu0 %v599
      %624 = vmatprep.subr.bf16.mxu0 0
      %625 = vmatpush1.bf16.msra.mxu0 0
      %626 = vmatprep.subr.bf16.mxu0 0
      %627 = vmatpush1.bf16.msra.mxu0 0
      %628 = vmatprep.subr.bf16.mxu0 0
      %629 = vmatpush1.bf16.msra.mxu0 0
      %630 = vmatprep.subr.bf16.mxu0 0
      %631 = vmatpush1.bf16.msra.mxu0 0
      %632 = vmatprep.subr.bf16.mxu0 0
      %633 = vmatpush1.bf16.msra.mxu0 0
      %634 = vmatprep.subr.bf16.mxu0 0
      %635 = vmatpush1.bf16.msra.mxu0 0
      %636 = vmatprep.subr.bf16.mxu0 0
      %637 = vmatpush1.bf16.msra.mxu0 0
      %638 = vmatprep.subr.bf16.mxu0 0
      %639 = vmatpush1.bf16.msra.mxu0 0
      %640 = vmatprep.mubr.bf16.mxu0 0
      %641 = vmatmul.mubr.bf16.gmra.mrb[0].mxu0 %v558
      %v642 = vpop.f32.mrb[0].mxu0
      %v643 = vadd.f32 %v350, %v642
      %v644 = vpop.f32.mrb[0].mxu0
      %v645 = vpop.f32.mrb[0].mxu0
      %v646 = vadd.f32 %v350, %v645
      %v647 = vpop.f32.mrb[0].mxu0
      %648 = vmatprep.mubr.bf16.mxu0 0
      %649 = vmatmul.mubr.bf16.gmra.mrb[0].mxu0 %v559
      %v650 = vpop.f32.mrb[0].mxu0
      %v651 = vadd.f32 %v350, %v650
      %v652 = vpop.f32.mrb[0].mxu0
      %v653 = vpop.f32.mrb[0].mxu0
      %v654 = vadd.f32 %v350, %v653
      %v655 = vpop.f32.mrb[0].mxu0
      %656 = vdwg.mxu0
      %657 = vst [vmem:[%s280] sm:$0xff] %v643
      %658 = vst [vmem:[%s280 + $0x8] sm:$0xff] %v646
      %659 = vst [vmem:[%s280 + $0x10] sm:$0xff] %v651
      %660 = vst [vmem:[%s280 + $0x18] sm:$0xff] %v654
      %s661 = scalar_lea.vmem %s274, 32
      %v662 = vld [vmem:[%s661] sm:$0xff]
      %v663 = vld [vmem:[%s661 + $0x8] sm:$0xff]
      %v664 = vld [vmem:[%s661 + $0x10] sm:$0xff]
      %v665 = vld [vmem:[%s661 + $0x18] sm:$0xff]
      %v666 = vpack.c.bf16 %v663, %v662
      %v667 = vpack.c.bf16 %v665, %v664
      %668 = vmatprep.subr.bf16.mxu0 0
      %669 = vmatpush1.bf16.msra.mxu0 %v390
      %670 = vmatprep.subr.bf16.mxu0 0
      %671 = vmatpush1.bf16.msra.mxu0 %v391
      %672 = vmatprep.subr.bf16.mxu0 0
      %673 = vmatpush1.bf16.msra.mxu0 %v392
      %674 = vmatprep.subr.bf16.mxu0 0
      %675 = vmatpush1.bf16.msra.mxu0 %v393
      %676 = vmatprep.subr.bf16.mxu0 0
      %677 = vmatpush1.bf16.msra.mxu0 %v394
      %678 = vmatprep.subr.bf16.mxu0 0
      %679 = vmatpush1.bf16.msra.mxu0 %v395
      %680 = vmatprep.subr.bf16.mxu0 0
      %681 = vmatpush1.bf16.msra.mxu0 %v396
      %682 = vmatprep.subr.bf16.mxu0 0
      %683 = vmatpush1.bf16.msra.mxu0 %v397
      %684 = vmatprep.subr.bf16.mxu0 0
      %685 = vmatpush1.bf16.msra.mxu0 0
      %686 = vmatprep.subr.bf16.mxu0 0
      %687 = vmatpush1.bf16.msra.mxu0 0
      %688 = vmatprep.subr.bf16.mxu0 0
      %689 = vmatpush1.bf16.msra.mxu0 0
      %690 = vmatprep.subr.bf16.mxu0 0
      %691 = vmatpush1.bf16.msra.mxu0 0
      %692 = vmatprep.subr.bf16.mxu0 0
      %693 = vmatpush1.bf16.msra.mxu0 0
      %694 = vmatprep.subr.bf16.mxu0 0
      %695 = vmatpush1.bf16.msra.mxu0 0
      %696 = vmatprep.subr.bf16.mxu0 0
      %697 = vmatpush1.bf16.msra.mxu0 0
      %698 = vmatprep.subr.bf16.mxu0 0
      %699 = vmatpush1.bf16.msra.mxu0 0
      %700 = vmatprep.mubr.bf16.mxu0 0
      %701 = vmatmul.mubr.bf16.gmra.mrb[0].mxu0 %v666
      %v702 = vpop.f32.mrb[0].mxu0
      %v703 = vadd.f32 %v336, %v702
      %v704 = vpop.f32.mrb[0].mxu0
      %v705 = vpop.f32.mrb[0].mxu0
      %v706 = vadd.f32 %v336, %v705
      %v707 = vpop.f32.mrb[0].mxu0
      %708 = vmatprep.mubr.bf16.mxu0 0
      %709 = vmatmul.mubr.bf16.gmra.mrb[0].mxu0 %v667
      %v710 = vpop.f32.mrb[0].mxu0
      %v711 = vadd.f32 %v336, %v710
      %v712 = vpop.f32.mrb[0].mxu0
      %v713 = vpop.f32.mrb[0].mxu0
      %v714 = vadd.f32 %v336, %v713
      %v715 = vpop.f32.mrb[0].mxu0
      %716 = vdwg.mxu0
      %v717 = vpack.c.bf16 %v706, %v703
      %v718 = vpack.c.bf16 %v714, %v711
      %v719 = vtanh.bf16.pop %v717
      %v720 = vtanh.bf16.pop %v718
      %721 = vmatprep.subr.bf16.mxu0 0
      %722 = vmatpush1.bf16.msra.mxu0 %v491
      %723 = vmatprep.subr.bf16.mxu0 0
      %724 = vmatpush1.bf16.msra.mxu0 %v492
      %725 = vmatprep.subr.bf16.mxu0 0
      %726 = vmatpush1.bf16.msra.mxu0 %v493
      %727 = vmatprep.subr.bf16.mxu0 0
      %728 = vmatpush1.bf16.msra.mxu0 %v494
      %729 = vmatprep.subr.bf16.mxu0 0
      %730 = vmatpush1.bf16.msra.mxu0 %v495
      %731 = vmatprep.subr.bf16.mxu0 0
      %732 = vmatpush1.bf16.msra.mxu0 %v496
      %733 = vmatprep.subr.bf16.mxu0 0
      %734 = vmatpush1.bf16.msra.mxu0 %v497
      %735 = vmatprep.subr.bf16.mxu0 0
      %736 = vmatpush1.bf16.msra.mxu0 %v498
      %737 = vmatprep.subr.bf16.mxu0 0
      %738 = vmatpush1.bf16.msra.mxu0 0
      %739 = vmatprep.subr.bf16.mxu0 0
      %740 = vmatpush1.bf16.msra.mxu0 0
      %741 = vmatprep.subr.bf16.mxu0 0
      %742 = vmatpush1.bf16.msra.mxu0 0
      %743 = vmatprep.subr.bf16.mxu0 0
      %744 = vmatpush1.bf16.msra.mxu0 0
      %745 = vmatprep.subr.bf16.mxu0 0
      %746 = vmatpush1.bf16.msra.mxu0 0
      %747 = vmatprep.subr.bf16.mxu0 0
      %748 = vmatpush1.bf16.msra.mxu0 0
      %749 = vmatprep.subr.bf16.mxu0 0
      %750 = vmatpush1.bf16.msra.mxu0 0
      %751 = vmatprep.subr.bf16.mxu0 0
      %752 = vmatpush1.bf16.msra.mxu0 0
      %753 = vmatprep.mubr.bf16.mxu0 0
      %754 = vmatmul.mubr.bf16.gmra.mrb[0].mxu0 %v719
      %v755 = vpop.f32.mrb[0].mxu0
      %v756 = vadd.f32 %v343, %v755
      %v757 = vpop.f32.mrb[0].mxu0
      %v758 = vpop.f32.mrb[0].mxu0
      %v759 = vadd.f32 %v343, %v758
      %v760 = vpop.f32.mrb[0].mxu0
      %761 = vmatprep.mubr.bf16.mxu0 0
      %762 = vmatmul.mubr.bf16.gmra.mrb[0].mxu0 %v720
      %v763 = vpop.f32.mrb[0].mxu0
      %v764 = vadd.f32 %v343, %v763
      %v765 = vpop.f32.mrb[0].mxu0
      %v766 = vpop.f32.mrb[0].mxu0
      %v767 = vadd.f32 %v343, %v766
      %v768 = vpop.f32.mrb[0].mxu0
      %769 = vdwg.mxu0
      %v770 = vpack.c.bf16 %v759, %v756
      %v771 = vpack.c.bf16 %v767, %v764
      %v772 = vtanh.bf16.pop %v770
      %v773 = vtanh.bf16.pop %v771
      %774 = vmatprep.subr.bf16.mxu0 0
      %775 = vmatpush1.bf16.msra.mxu0 %v592
      %776 = vmatprep.subr.bf16.mxu0 0
      %777 = vmatpush1.bf16.msra.mxu0 %v593
      %778 = vmatprep.subr.bf16.mxu0 0
      %779 = vmatpush1.bf16.msra.mxu0 %v594
      %780 = vmatprep.subr.bf16.mxu0 0
      %781 = vmatpush1.bf16.msra.mxu0 %v595
      %782 = vmatprep.subr.bf16.mxu0 0
      %783 = vmatpush1.bf16.msra.mxu0 %v596
      %784 = vmatprep.subr.bf16.mxu0 0
      %785 = vmatpush1.bf16.msra.mxu0 %v597
      %786 = vmatprep.subr.bf16.mxu0 0
      %787 = vmatpush1.bf16.msra.mxu0 %v598
      %788 = vmatprep.subr.bf16.mxu0 0
      %789 = vmatpush1.bf16.msra.mxu0 %v599
      %790 = vmatprep.subr.bf16.mxu0 0
      %791 = vmatpush1.bf16.msra.mxu0 0
      %792 = vmatprep.subr.bf16.mxu0 0
      %793 = vmatpush1.bf16.msra.mxu0 0
      %794 = vmatprep.subr.bf16.mxu0 0
      %795 = vmatpush1.bf16.msra.mxu0 0
      %796 = vmatprep.subr.bf16.mxu0 0
      %797 = vmatpush1.bf16.msra.mxu0 0
      %798 = vmatprep.subr.bf16.mxu0 0
      %799 = vmatpush1.bf16.msra.mxu0 0
      %800 = vmatprep.subr.bf16.mxu0 0
      %801 = vmatpush1.bf16.msra.mxu0 0
      %802 = vmatprep.subr.bf16.mxu0 0
      %803 = vmatpush1.bf16.msra.mxu0 0
      %804 = vmatprep.subr.bf16.mxu0 0
      %805 = vmatpush1.bf16.msra.mxu0 0
      %806 = vmatprep.mubr.bf16.mxu0 0
      %807 = vmatmul.mubr.bf16.gmra.mrb[0].mxu0 %v772
      %v808 = vpop.f32.mrb[0].mxu0
      %v809 = vadd.f32 %v350, %v808
      %v810 = vpop.f32.mrb[0].mxu0
      %v811 = vpop.f32.mrb[0].mxu0
      %v812 = vadd.f32 %v350, %v811
      %v813 = vpop.f32.mrb[0].mxu0
      %814 = vmatprep.mubr.bf16.mxu0 0
      %815 = vmatmul.mubr.bf16.gmra.mrb[0].mxu0 %v773
      %v816 = vpop.f32.mrb[0].mxu0
      %v817 = vadd.f32 %v350, %v816
      %v818 = vpop.f32.mrb[0].mxu0
      %v819 = vpop.f32.mrb[0].mxu0
      %v820 = vadd.f32 %v350, %v819
      %v821 = vpop.f32.mrb[0].mxu0
      %822 = vdwg.mxu0
      %s823 = scalar_lea.vmem %s280, 32
      %824 = vst [vmem:[%s823] sm:$0xff] %v809
      %825 = vst [vmem:[%s823 + $0x8] sm:$0xff] %v812
      %826 = vst [vmem:[%s823 + $0x10] sm:$0xff] %v817
      %827 = vst [vmem:[%s823 + $0x18] sm:$0xff] %v820
      %s828 = scalar_lea.vmem %s274, 64
      %v829 = vld [vmem:[%s828] sm:$0xff]
      %v830 = vld [vmem:[%s828 + $0x8] sm:$0xff]
      %v831 = vld [vmem:[%s828 + $0x10] sm:$0xff]
      %v832 = vld [vmem:[%s828 + $0x18] sm:$0xff]
      %v833 = vpack.c.bf16 %v830, %v829
      %v834 = vpack.c.bf16 %v832, %v831
      %835 = vmatprep.subr.bf16.mxu0 0
      %836 = vmatpush1.bf16.msra.mxu0 %v390
      %837 = vmatprep.subr.bf16.mxu0 0
      %838 = vmatpush1.bf16.msra.mxu0 %v391
      %839 = vmatprep.subr.bf16.mxu0 0
      %840 = vmatpush1.bf16.msra.mxu0 %v392
      %841 = vmatprep.subr.bf16.mxu0 0
      %842 = vmatpush1.bf16.msra.mxu0 %v393
      %843 = vmatprep.subr.bf16.mxu0 0
      %844 = vmatpush1.bf16.msra.mxu0 %v394
      %845 = vmatprep.subr.bf16.mxu0 0
      %846 = vmatpush1.bf16.msra.mxu0 %v395
      %847 = vmatprep.subr.bf16.mxu0 0
      %848 = vmatpush1.bf16.msra.mxu0 %v396
      %849 = vmatprep.subr.bf16.mxu0 0
      %850 = vmatpush1.bf16.msra.mxu0 %v397
      %851 = vmatprep.subr.bf16.mxu0 0
      %852 = vmatpush1.bf16.msra.mxu0 0
      %853 = vmatprep.subr.bf16.mxu0 0
      %854 = vmatpush1.bf16.msra.mxu0 0
      %855 = vmatprep.subr.bf16.mxu0 0
      %856 = vmatpush1.bf16.msra.mxu0 0
      %857 = vmatprep.subr.bf16.mxu0 0
      %858 = vmatpush1.bf16.msra.mxu0 0
      %859 = vmatprep.subr.bf16.mxu0 0
      %860 = vmatpush1.bf16.msra.mxu0 0
      %861 = vmatprep.subr.bf16.mxu0 0
      %862 = vmatpush1.bf16.msra.mxu0 0
      %863 = vmatprep.subr.bf16.mxu0 0
      %864 = vmatpush1.bf16.msra.mxu0 0
      %865 = vmatprep.subr.bf16.mxu0 0
      %866 = vmatpush1.bf16.msra.mxu0 0
      %867 = vmatprep.mubr.bf16.mxu0 0
      %868 = vmatmul.mubr.bf16.gmra.mrb[0].mxu0 %v833
      %v869 = vpop.f32.mrb[0].mxu0
      %v870 = vadd.f32 %v336, %v869
      %v871 = vpop.f32.mrb[0].mxu0
      %v872 = vpop.f32.mrb[0].mxu0
      %v873 = vadd.f32 %v336, %v872
      %v874 = vpop.f32.mrb[0].mxu0
      %875 = vmatprep.mubr.bf16.mxu0 0
      %876 = vmatmul.mubr.bf16.gmra.mrb[0].mxu0 %v834
      %v877 = vpop.f32.mrb[0].mxu0
      %v878 = vadd.f32 %v336, %v877
      %v879 = vpop.f32.mrb[0].mxu0
      %v880 = vpop.f32.mrb[0].mxu0
      %v881 = vadd.f32 %v336, %v880
      %v882 = vpop.f32.mrb[0].mxu0
      %883 = vdwg.mxu0
      %v884 = vpack.c.bf16 %v873, %v870
      %v885 = vpack.c.bf16 %v881, %v878
      %v886 = vtanh.bf16.pop %v884
      %v887 = vtanh.bf16.pop %v885
      %888 = vmatprep.subr.bf16.mxu0 0
      %889 = vmatpush1.bf16.msra.mxu0 %v491
      %890 = vmatprep.subr.bf16.mxu0 0
      %891 = vmatpush1.bf16.msra.mxu0 %v492
      %892 = vmatprep.subr.bf16.mxu0 0
      %893 = vmatpush1.bf16.msra.mxu0 %v493
      %894 = vmatprep.subr.bf16.mxu0 0
      %895 = vmatpush1.bf16.msra.mxu0 %v494
      %896 = vmatprep.subr.bf16.mxu0 0
      %897 = vmatpush1.bf16.msra.mxu0 %v495
      %898 = vmatprep.subr.bf16.mxu0 0
      %899 = vmatpush1.bf16.msra.mxu0 %v496
      %900 = vmatprep.subr.bf16.mxu0 0
      %901 = vmatpush1.bf16.msra.mxu0 %v497
      %902 = vmatprep.subr.bf16.mxu0 0
      %903 = vmatpush1.bf16.msra.mxu0 %v498
      %904 = vmatprep.subr.bf16.mxu0 0
      %905 = vmatpush1.bf16.msra.mxu0 0
      %906 = vmatprep.subr.bf16.mxu0 0
      %907 = vmatpush1.bf16.msra.mxu0 0
      %908 = vmatprep.subr.bf16.mxu0 0
      %909 = vmatpush1.bf16.msra.mxu0 0
      %910 = vmatprep.subr.bf16.mxu0 0
      %911 = vmatpush1.bf16.msra.mxu0 0
      %912 = vmatprep.subr.bf16.mxu0 0
      %913 = vmatpush1.bf16.msra.mxu0 0
      %914 = vmatprep.subr.bf16.mxu0 0
      %915 = vmatpush1.bf16.msra.mxu0 0
      %916 = vmatprep.subr.bf16.mxu0 0
      %917 = vmatpush1.bf16.msra.mxu0 0
      %918 = vmatprep.subr.bf16.mxu0 0
      %919 = vmatpush1.bf16.msra.mxu0 0
      %920 = vmatprep.mubr.bf16.mxu0 0
      %921 = vmatmul.mubr.bf16.gmra.mrb[0].mxu0 %v886
      %v922 = vpop.f32.mrb[0].mxu0
      %v923 = vadd.f32 %v343, %v922
      %v924 = vpop.f32.mrb[0].mxu0
      %v925 = vpop.f32.mrb[0].mxu0
      %v926 = vadd.f32 %v343, %v925
      %v927 = vpop.f32.mrb[0].mxu0
      %928 = vmatprep.mubr.bf16.mxu0 0
      %929 = vmatmul.mubr.bf16.gmra.mrb[0].mxu0 %v887
      %v930 = vpop.f32.mrb[0].mxu0
      %v931 = vadd.f32 %v343, %v930
      %v932 = vpop.f32.mrb[0].mxu0
      %v933 = vpop.f32.mrb[0].mxu0
      %v934 = vadd.f32 %v343, %v933
      %v935 = vpop.f32.mrb[0].mxu0
      %936 = vdwg.mxu0
      %v937 = vpack.c.bf16 %v926, %v923
      %v938 = vpack.c.bf16 %v934, %v931
      %v939 = vtanh.bf16.pop %v937
      %v940 = vtanh.bf16.pop %v938
      %941 = vmatprep.subr.bf16.mxu0 0
      %942 = vmatpush1.bf16.msra.mxu0 %v592
      %943 = vmatprep.subr.bf16.mxu0 0
      %944 = vmatpush1.bf16.msra.mxu0 %v593
      %945 = vmatprep.subr.bf16.mxu0 0
      %946 = vmatpush1.bf16.msra.mxu0 %v594
      %947 = vmatprep.subr.bf16.mxu0 0
      %948 = vmatpush1.bf16.msra.mxu0 %v595
      %949 = vmatprep.subr.bf16.mxu0 0
      %950 = vmatpush1.bf16.msra.mxu0 %v596
      %951 = vmatprep.subr.bf16.mxu0 0
      %952 = vmatpush1.bf16.msra.mxu0 %v597
      %953 = vmatprep.subr.bf16.mxu0 0
      %954 = vmatpush1.bf16.msra.mxu0 %v598
      %955 = vmatprep.subr.bf16.mxu0 0
      %956 = vmatpush1.bf16.msra.mxu0 %v599
      %957 = vmatprep.subr.bf16.mxu0 0
      %958 = vmatpush1.bf16.msra.mxu0 0
      %959 = vmatprep.subr.bf16.mxu0 0
      %960 = vmatpush1.bf16.msra.mxu0 0
      %961 = vmatprep.subr.bf16.mxu0 0
      %962 = vmatpush1.bf16.msra.mxu0 0
      %963 = vmatprep.subr.bf16.mxu0 0
      %964 = vmatpush1.bf16.msra.mxu0 0
      %965 = vmatprep.subr.bf16.mxu0 0
      %966 = vmatpush1.bf16.msra.mxu0 0
      %967 = vmatprep.subr.bf16.mxu0 0
      %968 = vmatpush1.bf16.msra.mxu0 0
      %969 = vmatprep.subr.bf16.mxu0 0
      %970 = vmatpush1.bf16.msra.mxu0 0
      %971 = vmatprep.subr.bf16.mxu0 0
      %972 = vmatpush1.bf16.msra.mxu0 0
      %973 = vmatprep.mubr.bf16.mxu0 0
      %974 = vmatmul.mubr.bf16.gmra.mrb[0].mxu0 %v939
      %v975 = vpop.f32.mrb[0].mxu0
      %v976 = vadd.f32 %v350, %v975
      %v977 = vpop.f32.mrb[0].mxu0
      %v978 = vpop.f32.mrb[0].mxu0
      %v979 = vadd.f32 %v350, %v978
      %v980 = vpop.f32.mrb[0].mxu0
      %981 = vmatprep.mubr.bf16.mxu0 0
      %982 = vmatmul.mubr.bf16.gmra.mrb[0].mxu0 %v940
      %v983 = vpop.f32.mrb[0].mxu0
      %v984 = vadd.f32 %v350, %v983
      %v985 = vpop.f32.mrb[0].mxu0
      %v986 = vpop.f32.mrb[0].mxu0
      %v987 = vadd.f32 %v350, %v986
      %v988 = vpop.f32.mrb[0].mxu0
      %989 = vdwg.mxu0
      %s990 = scalar_lea.vmem %s280, 64
      %991 = vst [vmem:[%s990] sm:$0xff] %v976
      %992 = vst [vmem:[%s990 + $0x8] sm:$0xff] %v979
      %993 = vst [vmem:[%s990 + $0x10] sm:$0xff] %v984
      %994 = vst [vmem:[%s990 + $0x18] sm:$0xff] %v987
      %s995 = scalar_lea.vmem %s274, 96
      %v996 = vld [vmem:[%s995] sm:$0xff]
      %v997 = vld [vmem:[%s995 + $0x8] sm:$0xff]
      %v998 = vld [vmem:[%s995 + $0x10] sm:$0xff]
      %v999 = vld [vmem:[%s995 + $0x18] sm:$0xff]
      %v1000 = vpack.c.bf16 %v997, %v996
      %v1001 = vpack.c.bf16 %v999, %v998
      %1002 = vmatprep.subr.bf16.mxu0 0
      %1003 = vmatpush1.bf16.msra.mxu0 %v390
      %1004 = vmatprep.subr.bf16.mxu0 0
      %1005 = vmatpush1.bf16.msra.mxu0 %v391
      %1006 = vmatprep.subr.bf16.mxu0 0
      %1007 = vmatpush1.bf16.msra.mxu0 %v392
      %1008 = vmatprep.subr.bf16.mxu0 0
      %1009 = vmatpush1.bf16.msra.mxu0 %v393
      %1010 = vmatprep.subr.bf16.mxu0 0
      %1011 = vmatpush1.bf16.msra.mxu0 %v394
      %1012 = vmatprep.subr.bf16.mxu0 0
      %1013 = vmatpush1.bf16.msra.mxu0 %v395
      %1014 = vmatprep.subr.bf16.mxu0 0
      %1015 = vmatpush1.bf16.msra.mxu0 %v396
      %1016 = vmatprep.subr.bf16.mxu0 0
      %1017 = vmatpush1.bf16.msra.mxu0 %v397
      %1018 = vmatprep.subr.bf16.mxu0 0
      %1019 = vmatpush1.bf16.msra.mxu0 0
      %1020 = vmatprep.subr.bf16.mxu0 0
      %1021 = vmatpush1.bf16.msra.mxu0 0
      %1022 = vmatprep.subr.bf16.mxu0 0
      %1023 = vmatpush1.bf16.msra.mxu0 0
      %1024 = vmatprep.subr.bf16.mxu0 0
      %1025 = vmatpush1.bf16.msra.mxu0 0
      %1026 = vmatprep.subr.bf16.mxu0 0
      %1027 = vmatpush1.bf16.msra.mxu0 0
      %1028 = vmatprep.subr.bf16.mxu0 0
      %1029 = vmatpush1.bf16.msra.mxu0 0
      %1030 = vmatprep.subr.bf16.mxu0 0
      %1031 = vmatpush1.bf16.msra.mxu0 0
      %1032 = vmatprep.subr.bf16.mxu0 0
      %1033 = vmatpush1.bf16.msra.mxu0 0
      %1034 = vmatprep.mubr.bf16.mxu0 0
      %1035 = vmatmul.mubr.bf16.gmra.mrb[0].mxu0 %v1000
      %v1036 = vpop.f32.mrb[0].mxu0
      %v1037 = vadd.f32 %v336, %v1036
      %v1038 = vpop.f32.mrb[0].mxu0
      %v1039 = vpop.f32.mrb[0].mxu0
      %v1040 = vadd.f32 %v336, %v1039
      %v1041 = vpop.f32.mrb[0].mxu0
      %1042 = vmatprep.mubr.bf16.mxu0 0
      %1043 = vmatmul.mubr.bf16.gmra.mrb[0].mxu0 %v1001
      %v1044 = vpop.f32.mrb[0].mxu0
      %v1045 = vadd.f32 %v336, %v1044
      %v1046 = vpop.f32.mrb[0].mxu0
      %v1047 = vpop.f32.mrb[0].mxu0
      %v1048 = vadd.f32 %v336, %v1047
      %v1049 = vpop.f32.mrb[0].mxu0
      %1050 = vdwg.mxu0
      %v1051 = vpack.c.bf16 %v1040, %v1037
      %v1052 = vpack.c.bf16 %v1048, %v1045
      %v1053 = vtanh.bf16.pop %v1051
      %v1054 = vtanh.bf16.pop %v1052
      %1055 = vmatprep.subr.bf16.mxu0 0
      %1056 = vmatpush1.bf16.msra.mxu0 %v491
      %1057 = vmatprep.subr.bf16.mxu0 0
      %1058 = vmatpush1.bf16.msra.mxu0 %v492
      %1059 = vmatprep.subr.bf16.mxu0 0
      %1060 = vmatpush1.bf16.msra.mxu0 %v493
      %1061 = vmatprep.subr.bf16.mxu0 0
      %1062 = vmatpush1.bf16.msra.mxu0 %v494
      %1063 = vmatprep.subr.bf16.mxu0 0
      %1064 = vmatpush1.bf16.msra.mxu0 %v495
      %1065 = vmatprep.subr.bf16.mxu0 0
      %1066 = vmatpush1.bf16.msra.mxu0 %v496
      %1067 = vmatprep.subr.bf16.mxu0 0
      %1068 = vmatpush1.bf16.msra.mxu0 %v497
      %1069 = vmatprep.subr.bf16.mxu0 0
      %1070 = vmatpush1.bf16.msra.mxu0 %v498
      %1071 = vmatprep.subr.bf16.mxu0 0
      %1072 = vmatpush1.bf16.msra.mxu0 0
      %1073 = vmatprep.subr.bf16.mxu0 0
      %1074 = vmatpush1.bf16.msra.mxu0 0
      %1075 = vmatprep.subr.bf16.mxu0 0
      %1076 = vmatpush1.bf16.msra.mxu0 0
      %1077 = vmatprep.subr.bf16.mxu0 0
      %1078 = vmatpush1.bf16.msra.mxu0 0
      %1079 = vmatprep.subr.bf16.mxu0 0
      %1080 = vmatpush1.bf16.msra.mxu0 0
      %1081 = vmatprep.subr.bf16.mxu0 0
      %1082 = vmatpush1.bf16.msra.mxu0 0
      %1083 = vmatprep.subr.bf16.mxu0 0
      %1084 = vmatpush1.bf16.msra.mxu0 0
      %1085 = vmatprep.subr.bf16.mxu0 0
      %1086 = vmatpush1.bf16.msra.mxu0 0
      %1087 = vmatprep.mubr.bf16.mxu0 0
      %1088 = vmatmul.mubr.bf16.gmra.mrb[0].mxu0 %v1053
      %v1089 = vpop.f32.mrb[0].mxu0
      %v1090 = vadd.f32 %v343, %v1089
      %v1091 = vpop.f32.mrb[0].mxu0
      %v1092 = vpop.f32.mrb[0].mxu0
      %v1093 = vadd.f32 %v343, %v1092
      %v1094 = vpop.f32.mrb[0].mxu0
      %1095 = vmatprep.mubr.bf16.mxu0 0
      %1096 = vmatmul.mubr.bf16.gmra.mrb[0].mxu0 %v1054
      %v1097 = vpop.f32.mrb[0].mxu0
      %v1098 = vadd.f32 %v343, %v1097
      %v1099 = vpop.f32.mrb[0].mxu0
      %v1100 = vpop.f32.mrb[0].mxu0
      %v1101 = vadd.f32 %v343, %v1100
      %v1102 = vpop.f32.mrb[0].mxu0
      %1103 = vdwg.mxu0
      %v1104 = vpack.c.bf16 %v1093, %v1090
      %v1105 = vpack.c.bf16 %v1101, %v1098
      %v1106 = vtanh.bf16.pop %v1104
      %v1107 = vtanh.bf16.pop %v1105
      %1108 = vmatprep.subr.bf16.mxu0 0
      %1109 = vmatpush1.bf16.msra.mxu0 %v592
      %1110 = vmatprep.subr.bf16.mxu0 0
      %1111 = vmatpush1.bf16.msra.mxu0 %v593
      %1112 = vmatprep.subr.bf16.mxu0 0
      %1113 = vmatpush1.bf16.msra.mxu0 %v594
      %1114 = vmatprep.subr.bf16.mxu0 0
      %1115 = vmatpush1.bf16.msra.mxu0 %v595
      %1116 = vmatprep.subr.bf16.mxu0 0
      %1117 = vmatpush1.bf16.msra.mxu0 %v596
      %1118 = vmatprep.subr.bf16.mxu0 0
      %1119 = vmatpush1.bf16.msra.mxu0 %v597
      %1120 = vmatprep.subr.bf16.mxu0 0
      %1121 = vmatpush1.bf16.msra.mxu0 %v598
      %1122 = vmatprep.subr.bf16.mxu0 0
      %1123 = vmatpush1.bf16.msra.mxu0 %v599
      %1124 = vmatprep.subr.bf16.mxu0 0
      %1125 = vmatpush1.bf16.msra.mxu0 0
      %1126 = vmatprep.subr.bf16.mxu0 0
      %1127 = vmatpush1.bf16.msra.mxu0 0
      %1128 = vmatprep.subr.bf16.mxu0 0
      %1129 = vmatpush1.bf16.msra.mxu0 0
      %1130 = vmatprep.subr.bf16.mxu0 0
      %1131 = vmatpush1.bf16.msra.mxu0 0
      %1132 = vmatprep.subr.bf16.mxu0 0
      %1133 = vmatpush1.bf16.msra.mxu0 0
      %1134 = vmatprep.subr.bf16.mxu0 0
      %1135 = vmatpush1.bf16.msra.mxu0 0
      %1136 = vmatprep.subr.bf16.mxu0 0
      %1137 = vmatpush1.bf16.msra.mxu0 0
      %1138 = vmatprep.subr.bf16.mxu0 0
      %1139 = vmatpush1.bf16.msra.mxu0 0
      %1140 = vmatprep.mubr.bf16.mxu0 0
      %1141 = vmatmul.mubr.bf16.gmra.mrb[0].mxu0 %v1106
      %v1142 = vpop.f32.mrb[0].mxu0
      %v1143 = vadd.f32 %v350, %v1142
      %v1144 = vpop.f32.mrb[0].mxu0
      %v1145 = vpop.f32.mrb[0].mxu0
      %v1146 = vadd.f32 %v350, %v1145
      %v1147 = vpop.f32.mrb[0].mxu0
      %1148 = vmatprep.mubr.bf16.mxu0 0
      %1149 = vmatmul.mubr.bf16.gmra.mrb[0].mxu0 %v1107
      %v1150 = vpop.f32.mrb[0].mxu0
      %v1151 = vadd.f32 %v350, %v1150
      %v1152 = vpop.f32.mrb[0].mxu0
      %v1153 = vpop.f32.mrb[0].mxu0
      %v1154 = vadd.f32 %v350, %v1153
      %v1155 = vpop.f32.mrb[0].mxu0
      %1156 = vdwg.mxu0
      %s1157 = scalar_lea.vmem %s280, 96
      %1158 = vst [vmem:[%s1157] sm:$0xff] %v1143
      %1159 = vst [vmem:[%s1157 + $0x8] sm:$0xff] %v1146
      %1160 = vst [vmem:[%s1157 + $0x10] sm:$0xff] %v1151
      %1161 = vst [vmem:[%s1157 + $0x18] sm:$0xff] %v1154
      %s1162 = smul.u32 16, %s18
      %p1163 = scmp.lt.s32.totalorder %s1162, 31
      %s1164 = scalar_select %p1163, %s1162, 31
      %s1165 = smul.addr %s1164, 8
      %s1166 = scalar_lea.vmem %s7, %s1165
      // Predicated region
      $region49: #{discrete_mmp_forward.1} parent=47 // pred_check
        %p1167 = pneg %p188
      $region50: #{discrete_mmp_forward.1} parent=47 // pred_check_branch
        %1169 = sbr.rel (%p1167) target = $region52
      $region51: #{discrete_mmp_forward.1} parent=47 // pred_region
        %s1170 = smul.u32 16, %s18
      $region52: #{discrete_mmp_forward.1} parent=47 // pred_fallthru
        _
    $region48: #{discrete_mmp_forward.1} parent=5 // pred_fallthru
      _
    %p1171 = scmp.le.s32.totalorder 2, %s13
    // Predicated region
    $region53: #{discrete_mmp_forward.1} parent=5 // pred_check
      %p1172 = pneg %p1171
    $region54: #{discrete_mmp_forward.1} parent=5 // pred_check_branch
      %1174 = sbr.rel (%p1172) target = $region56
    $region55: #{discrete_mmp_forward.1} parent=5 // pred_region
      %s1175 = ssub.s32 %s13, 2
      // Predicated region
      $region57: #{discrete_mmp_forward.1} parent=55 // pred_check
        %p1176 = pneg %p194
      $region58: #{discrete_mmp_forward.1} parent=55 // pred_check_branch
        %1178 = sbr.rel (%p1176) target = $region60
      $region59: #{discrete_mmp_forward.1} parent=55 // pred_region
        %s1179 = smul.u32 16, %s19
        %p1180 = scmp.lt.s32.totalorder %s1179, 31
        %s1181 = scalar_select %p1180, %s1179, 31
        %s1182 = smul.addr %s1181, 8
        %s1183 = scalar_lea.vmem %s7, %s1182
      $region60: #{discrete_mmp_forward.1} parent=55 // pred_fallthru
        _
    $region56: #{discrete_mmp_forward.1} parent=5 // pred_fallthru
      _
  $region6: #{discrete_mmp_forward.1} parent=0 // loop_footer
    %s17 = sadd.s32 1, %s13
  $region7: #{discrete_mmp_forward.1} parent=0 // loop_footer_branch
    %12 = sbr.rel target = $region3
  $region8: #{discrete_mmp_forward.1} parent=0 // loop_exit
    _

</llo_original>
